<compile_context>
chip_gen: v7x
topology: tpu7x:2x2x1
jax: 0.10.0
libtpu: 0.0.40
codegen_flags: <defaults>
</compile_context>

<pallas_src>
import numpy as np
import jax
import jax.numpy as jnp
from jax.experimental import pallas as pl
from jax.experimental.pallas import tpu as pltpu

# ---- criterion hyper-parameters (args.criteria / args.data_specs) ----
RGB_WEIGHT = 0.5
DEPTH_WEIGHT = 1.0
SDF_WEIGHT = 1000.0
FS_WEIGHT = 10.0
TRUNCATION = 0.1
MAX_DEPTH = 5.0


def _criterion_kernel(per_ray_ref, z_ref, sdf_ref, out_ref,
                      d_acc, v_acc, c_acc, fs_acc, nfs_acc, sdf_acc, nsdf_acc):
    """Per grid step: build masks, select residuals, sublane-reduce into (1, TN)
    accumulators.  Last step reduces to 7 scalars in the SMEM output:
       out[0] sum |gt_d - pred_d| * valid      out[1] count(valid)
       out[2] sum |gt_c - pred_c| * valid      out[3] sum fs squared error
       out[4] count_nonzero(front_mask)        out[5] sum sdf squared error
       out[6] count_nonzero(sdf_mask)
    """
    i = pl.program_id(0)
    last = pl.num_programs(0) - 1
    f32 = jnp.float32

    @pl.when(i == 0)
    def _():
        for acc in (d_acc, v_acc, c_acc, fs_acc, nfs_acc, sdf_acc, nsdf_acc):
            acc[...] = jnp.zeros_like(acc)

    per_ray = per_ray_ref[...]            # (8, TN) packed per-ray quantities
    gt_d = per_ray[0:1, :]                # (1, TN)
    pr_d = per_ray[1:2, :]                # (1, TN)
    gt_c = per_ray[2:5, :]                # (3, TN)
    pr_c = per_ray[5:8, :]                # (3, TN)

    # ---- depth / color terms (ray granularity) ----
    valid_b = jnp.logical_and(gt_d > 0.01, gt_d < MAX_DEPTH)          # (1, TN) bool
    d_acc[...] = d_acc[...] + jnp.where(valid_b, jnp.abs(gt_d - pr_d), 0.0)
    v_acc[...] = v_acc[...] + valid_b.astype(f32)
    c_acc[...] = c_acc[...] + jnp.sum(
        jnp.where(valid_b, jnp.abs(gt_c - pr_c), 0.0), axis=0, keepdims=True)

    # ---- sdf / free-space terms (sample granularity) ----
    z = z_ref[...]                        # (S, TN)
    sdf = sdf_ref[...]                    # (S, TN)

    # ray-level math hoisted to (1, TN); broadcast happens only inside the compares
    lo = gt_d - TRUNCATION                                             # (1, TN)
    hi = gt_d + TRUNCATION                                             # (1, TN)
    dmask_b = jnp.logical_and(gt_d > 0.0, gt_d < MAX_DEPTH)            # (1, TN)

    front_b = z < lo                                                   # (S, TN) bool
    back_b = z > hi                                                    # (S, TN) bool
    sdf_mask_b = jnp.logical_and(
        jnp.logical_not(front_b),
        jnp.logical_and(jnp.logical_not(back_b), dmask_b))             # (S, TN) bool

    nfs_acc[...] = nfs_acc[...] + jnp.sum(
        front_b.astype(f32), axis=0, keepdims=True)
    nsdf_acc[...] = nsdf_acc[...] + jnp.sum(
        sdf_mask_b.astype(f32), axis=0, keepdims=True)
    # fs:  (sdf*front - 1*front)^2 == (sdf - 1)^2 selected where front
    fs_acc[...] = fs_acc[...] + jnp.sum(
        jnp.where(front_b, jnp.square(sdf - 1.0), 0.0), axis=0, keepdims=True)
    # sdf: ((z + sdf*T)*m - d*m)^2 == (z + sdf*T - d)^2 selected where m
    sdf_acc[...] = sdf_acc[...] + jnp.sum(
        jnp.where(sdf_mask_b, jnp.square(z + sdf * TRUNCATION - gt_d), 0.0),
        axis=0, keepdims=True)

    @pl.when(i == last)
    def _():
        out_ref[0] = jnp.sum(d_acc[...])
        out_ref[1] = jnp.sum(v_acc[...])
        out_ref[2] = jnp.sum(c_acc[...])
        out_ref[3] = jnp.sum(fs_acc[...])
        out_ref[4] = jnp.sum(nfs_acc[...])
        out_ref[5] = jnp.sum(sdf_acc[...])
        out_ref[6] = jnp.sum(nsdf_acc[...])


def _round_up(x, m):
    return ((x + m - 1) // m) * m


def criterion_loss(gt_depth, pred_depth, gt_color, pred_color, z_vals, pred_sdf,
                   *, max_tile_n=2048):
    n, s = z_vals.shape
    f32 = jnp.float32

    # lane-dense tiling over rays: tile is a multiple of 128 lanes, as large as sensible
    tile_n = min(_round_up(max_tile_n, 128), _round_up(n, 128))
    n_pad = _round_up(n, tile_n)
    pad = n_pad - n
    n_steps = n_pad // tile_n

    # pack the four tiny per-ray inputs into one (8, N) array -> single DMA per tile
    per_ray = jnp.concatenate([
        gt_depth.reshape(1, n).astype(f32),
        pred_depth.reshape(1, n).astype(f32),
        gt_color.astype(f32).T,
        pred_color.astype(f32).T,
    ], axis=0)                                                   # (8, n)
    per_ray = jnp.pad(per_ray, ((0, 0), (0, pad)))               # pad gt_d = 0 -> all masks 0
    # TODO(synk): if the producer emits z_vals/pred_sdf as (S, N) directly, these
    # transpose+pad copies of the two dominant arrays (extra HBM read+write) disappear.
    z_t = jnp.pad(z_vals.astype(f32).T, ((0, 0), (0, pad)))      # (S, n_pad), pad z = 0
    sdf_t = jnp.pad(pred_sdf.astype(f32).T, ((0, 0), (0, pad)))  # (S, n_pad)

    cost = pl.CostEstimate(
        flops=int(18 * n_pad * s),
        transcendentals=0,
        bytes_accessed=int(4 * n_pad * (8 + 2 * s) + 4 * 8),
    )

    # TODO(synk): on v7x, emitting per-step partial sums (parallel ray axis) would use
    # both TensorCores; kept single-core resident-accumulator form for simplicity.
    acc = pl.pallas_call(
        _criterion_kernel,
        out_shape=jax.ShapeDtypeStruct((7,), jnp.float32),
        grid_spec=pltpu.PrefetchScalarGridSpec(
            num_scalar_prefetch=0,
            grid=(n_steps,),
            in_specs=[
                pl.BlockSpec((8, tile_n), lambda i: (0, i)),   # packed per-ray
                pl.BlockSpec((s, tile_n), lambda i: (0, i)),   # z_vals (transposed)
                pl.BlockSpec((s, tile_n), lambda i: (0, i)),   # pred_sdf (transposed)
            ],
            out_specs=pl.BlockSpec(memory_space=pltpu.MemorySpace.SMEM),
            scratch_shapes=[pltpu.VMEM((1, tile_n), f32) for _ in range(7)],
        ),
        compiler_params=pltpu.CompilerParams(
            dimension_semantics=("arbitrary",),
            vmem_limit_bytes=32 * 1024 * 1024,
        ),
        cost_estimate=cost,
    )(per_ray, z_t, sdf_t)

    depth_sum, depth_cnt, color_sum, fs_sum, num_fs, sdf_sum, num_sdf = (
        acc[0], acc[1], acc[2], acc[3], acc[4], acc[5], acc[6])

    total = jnp.float32(n * s)      # TRUE element count (padding contributes zero)
    cnt_safe = jnp.maximum(depth_cnt, 1.0)            # guard against empty valid set
    depth_loss = depth_sum / cnt_safe
    color_loss = color_sum / (3.0 * cnt_safe)
    num_samples = jnp.maximum(num_fs + num_sdf, 1.0)  # guard against zero samples
    fs_w = 1.0 - num_fs / num_samples
    sdf_w = 1.0 - num_sdf / num_samples
    fs_loss = (fs_sum / total) * fs_w
    sdf_loss = (sdf_sum / total) * sdf_w

    # TODO(synk): weight_depth_loss branch (torch.median over data-dependent subset) not implemented.
    return (DEPTH_WEIGHT * depth_loss + RGB_WEIGHT * color_loss
            + FS_WEIGHT * fs_loss + SDF_WEIGHT * sdf_loss)


def reference_loss(img, depth, ray_mask, pred_depth, pred_color, pred_sdf, z_vals):
    """Pure numpy reference reproducing the PyTorch forward semantics."""
    gt_depth = depth[ray_mask]
    gt_color = img[ray_mask]
    valid = (gt_depth > 0.01) & (gt_depth < MAX_DEPTH)
    depth_loss = np.abs(gt_depth - pred_depth)[valid].mean()
    color_loss = np.abs(gt_color - pred_color)[valid].mean()

    de = gt_depth[:, None] * np.ones_like(z_vals)
    front = np.where(z_vals < de - TRUNCATION, 1.0, 0.0).astype(np.float32)
    back = np.where(z_vals > de + TRUNCATION, 1.0, 0.0).astype(np.float32)
    dmask = np.where((de > 0.0) & (de < MAX_DEPTH), 1.0, 0.0).astype(np.float32)
    sdf_mask = (1.0 - front) * (1.0 - back) * dmask
    num_fs = float(np.count_nonzero(front))
    num_sdf = float(np.count_nonzero(sdf_mask))
    num_samples = num_fs + num_sdf
    fs_w = 1.0 - num_fs / num_samples
    sdf_w = 1.0 - num_sdf / num_samples
    fs_loss = np.mean(np.square(pred_sdf * front - front)) * fs_w
    sdf_loss = np.mean(np.square((z_vals + pred_sdf * TRUNCATION) * sdf_mask - de * sdf_mask)) * sdf_w
    return (DEPTH_WEIGHT * depth_loss + RGB_WEIGHT * color_loss
            + FS_WEIGHT * fs_loss + SDF_WEIGHT * sdf_loss)


def _run_case(key, ray_mask, H=16, W=16, S=16, max_tile_n=2048):
    mask_np = np.asarray(ray_mask)
    N = int(mask_np.sum())

    ks = jax.random.split(key, 6)
    img = jax.random.uniform(ks[0], (H, W, 3), jnp.float32)
    depth = jax.random.uniform(ks[1], (H, W), jnp.float32, minval=0.05, maxval=4.0)
    pred_depth = jax.random.uniform(ks[2], (N,), jnp.float32, minval=0.05, maxval=4.0)
    pred_color = jax.random.uniform(ks[3], (N, 3), jnp.float32)
    z_vals = jax.random.uniform(ks[4], (N, S), jnp.float32, minval=0.0, maxval=4.5)
    pred_sdf = jax.random.uniform(ks[5], (N, S), jnp.float32, minval=-1.0, maxval=1.0)

    # Glue: boolean ray-mask gather (data-dependent output size) done host-side.
    img_np = np.asarray(img)
    depth_np = np.asarray(depth)
    gt_depth = jnp.asarray(depth_np[mask_np])      # (N,)
    gt_color = jnp.asarray(img_np[mask_np])        # (N, 3)

    loss = criterion_loss(gt_depth, pred_depth, gt_color, pred_color,
                          z_vals, pred_sdf, max_tile_n=max_tile_n)
    loss = jax.block_until_ready(loss)

    ref = reference_loss(img_np, depth_np, mask_np, np.asarray(pred_depth),
                         np.asarray(pred_color), np.asarray(pred_sdf), np.asarray(z_vals))
    np.testing.assert_allclose(float(loss), float(ref), rtol=1e-4, atol=1e-5)


if __name__ == "__main__":
    key = jax.random.PRNGKey(0)
    H, W = 16, 16

    # Case 1: N = 128 rays, single grid step (whole problem in one tile).
    mask1 = (jnp.arange(H * W) % 2 == 0).reshape(H, W)
    # Case 2: N = 200 rays with max_tile_n=128 -> pads to 256, 2 grid steps
    # (exercises ray padding AND cross-step accumulation).
    mask2 = (jnp.arange(H * W) < 200).reshape(H, W)

    k1, k2 = jax.random.split(key)
    _run_case(k1, mask1)
    _run_case(k2, mask2, max_tile_n=128)

    print("KERNEL_OK")
</pallas_src>

<mosaic_0001>
module attributes {stable_mosaic.version = 11 : i64} {
  func.func @_criterion_kernel(%arg0: i32, %arg1: memref<8x128xf32, #tpu.memory_space<vmem>>, %arg2: memref<16x128xf32, #tpu.memory_space<vmem>>, %arg3: memref<16x128xf32, #tpu.memory_space<vmem>>, %arg4: memref<7xf32, #tpu.memory_space<smem>>, %arg5: memref<1x128xf32, #tpu.memory_space<vmem>>, %arg6: memref<1x128xf32, #tpu.memory_space<vmem>>, %arg7: memref<1x128xf32, #tpu.memory_space<vmem>>, %arg8: memref<1x128xf32, #tpu.memory_space<vmem>>, %arg9: memref<1x128xf32, #tpu.memory_space<vmem>>, %arg10: memref<1x128xf32, #tpu.memory_space<vmem>>, %arg11: memref<1x128xf32, #tpu.memory_space<vmem>>) attributes {dimension_semantics = [#tpu.dimension_semantics<arbitrary>], iteration_bounds = array<i64: 1>, scalar_prefetch = 0 : i64, scratch_operands = 7 : i64, tpu.core_type = #tpu.core_type<tc>, window_params = [{transform_indices = @transform_0, window_bounds = array<i64: 8, 128>}, {transform_indices = @transform_1, window_bounds = array<i64: 16, 128>}, {transform_indices = @transform_2, window_bounds = array<i64: 16, 128>}, {transform_indices = @transform_3, window_bounds = array<i64: 7>}]} {
    %c0_i32 = arith.constant 0 : i32
    %0 = arith.cmpi eq, %arg0, %c0_i32 : i32
    %1 = arith.extui %0 : i1 to i32
    %c0_i32_0 = arith.constant 0 : i32
    %2 = arith.cmpi ne, %1, %c0_i32_0 : i32
    scf.if %2 {
      %cst_54 = arith.constant 0.000000e+00 : f32
      %96 = vector.broadcast %cst_54 : f32 to vector<1x128xf32>
      %c0_55 = arith.constant 0 : index
      %c0_56 = arith.constant 0 : index
      %97 = vector.load %arg5[%c0_55, %c0_56] : memref<1x128xf32, #tpu.memory_space<vmem>>, vector<1x128xf32>
      tpu.vector_store %arg5[%c0_55, %c0_56], %96 {strides = array<i32>} : memref<1x128xf32, #tpu.memory_space<vmem>>, vector<1x128xf32>,
      %cst_57 = arith.constant 0.000000e+00 : f32
      %98 = vector.broadcast %cst_57 : f32 to vector<1x128xf32>
      %c0_58 = arith.constant 0 : index
      %c0_59 = arith.constant 0 : index
      %99 = vector.load %arg6[%c0_58, %c0_59] : memref<1x128xf32, #tpu.memory_space<vmem>>, vector<1x128xf32>
      tpu.vector_store %arg6[%c0_58, %c0_59], %98 {strides = array<i32>} : memref<1x128xf32, #tpu.memory_space<vmem>>, vector<1x128xf32>,
      %cst_60 = arith.constant 0.000000e+00 : f32
      %100 = vector.broadcast %cst_60 : f32 to vector<1x128xf32>
      %c0_61 = arith.constant 0 : index
      %c0_62 = arith.constant 0 : index
      %101 = vector.load %arg7[%c0_61, %c0_62] : memref<1x128xf32, #tpu.memory_space<vmem>>, vector<1x128xf32>
      tpu.vector_store %arg7[%c0_61, %c0_62], %100 {strides = array<i32>} : memref<1x128xf32, #tpu.memory_space<vmem>>, vector<1x128xf32>,
      %cst_63 = arith.constant 0.000000e+00 : f32
      %102 = vector.broadcast %cst_63 : f32 to vector<1x128xf32>
      %c0_64 = arith.constant 0 : index
      %c0_65 = arith.constant 0 : index
      %103 = vector.load %arg8[%c0_64, %c0_65] : memref<1x128xf32, #tpu.memory_space<vmem>>, vector<1x128xf32>
      tpu.vector_store %arg8[%c0_64, %c0_65], %102 {strides = array<i32>} : memref<1x128xf32, #tpu.memory_space<vmem>>, vector<1x128xf32>,
      %cst_66 = arith.constant 0.000000e+00 : f32
      %104 = vector.broadcast %cst_66 : f32 to vector<1x128xf32>
      %c0_67 = arith.constant 0 : index
      %c0_68 = arith.constant 0 : index
      %105 = vector.load %arg9[%c0_67, %c0_68] : memref<1x128xf32, #tpu.memory_space<vmem>>, vector<1x128xf32>
      tpu.vector_store %arg9[%c0_67, %c0_68], %104 {strides = array<i32>} : memref<1x128xf32, #tpu.memory_space<vmem>>, vector<1x128xf32>,
      %cst_69 = arith.constant 0.000000e+00 : f32
      %106 = vector.broadcast %cst_69 : f32 to vector<1x128xf32>
      %c0_70 = arith.constant 0 : index
      %c0_71 = arith.constant 0 : index
      %107 = vector.load %arg10[%c0_70, %c0_71] : memref<1x128xf32, #tpu.memory_space<vmem>>, vector<1x128xf32>
      tpu.vector_store %arg10[%c0_70, %c0_71], %106 {strides = array<i32>} : memref<1x128xf32, #tpu.memory_space<vmem>>, vector<1x128xf32>,
      %cst_72 = arith.constant 0.000000e+00 : f32
      %108 = vector.broadcast %cst_72 : f32 to vector<1x128xf32>
      %c0_73 = arith.constant 0 : index
      %c0_74 = arith.constant 0 : index
      %109 = vector.load %arg11[%c0_73, %c0_74] : memref<1x128xf32, #tpu.memory_space<vmem>>, vector<1x128xf32>
      tpu.vector_store %arg11[%c0_73, %c0_74], %108 {strides = array<i32>} : memref<1x128xf32, #tpu.memory_space<vmem>>, vector<1x128xf32>,
    } else {
    }
    %c0 = arith.constant 0 : index
    %c0_1 = arith.constant 0 : index
    %3 = vector.load %arg1[%c0, %c0_1] : memref<8x128xf32, #tpu.memory_space<vmem>>, vector<8x128xf32>
    %4 = vector.extract_strided_slice %3 {offsets = [0, 0], sizes = [1, 128], strides = [1, 1]} : vector<8x128xf32> to vector<1x128xf32>
    %5 = vector.extract_strided_slice %3 {offsets = [1, 0], sizes = [1, 128], strides = [1, 1]} : vector<8x128xf32> to vector<1x128xf32>
    %6 = vector.extract_strided_slice %3 {offsets = [2, 0], sizes = [3, 128], strides = [1, 1]} : vector<8x128xf32> to vector<3x128xf32>
    %7 = vector.extract_strided_slice %3 {offsets = [5, 0], sizes = [3, 128], strides = [1, 1]} : vector<8x128xf32> to vector<3x128xf32>
    %cst = arith.constant 0.00999999977 : f32
    %8 = vector.broadcast %cst : f32 to vector<1x128xf32>
    %9 = arith.cmpf ogt, %4, %8 : vector<1x128xf32>
    %cst_2 = arith.constant 5.000000e+00 : f32
    %10 = vector.broadcast %cst_2 : f32 to vector<1x128xf32>
    %11 = arith.cmpf olt, %4, %10 : vector<1x128xf32>
    %12 = arith.andi %9, %11 : vector<1x128xi1>
    %c0_3 = arith.constant 0 : index
    %c0_4 = arith.constant 0 : index
    %13 = vector.load %arg5[%c0_3, %c0_4] : memref<1x128xf32, #tpu.memory_space<vmem>>, vector<1x128xf32>
    %14 = arith.subf %4, %5 : vector<1x128xf32>
    %15 = math.absf %14 : vector<1x128xf32>
    %cst_5 = arith.constant 0.000000e+00 : f32
    %16 = vector.broadcast %cst_5 : f32 to vector<1x128xf32>
    %17 = arith.select %12, %15, %16 : vector<1x128xi1>, vector<1x128xf32>
    %18 = arith.addf %13, %17 : vector<1x128xf32>
    %c0_6 = arith.constant 0 : index
    %c0_7 = arith.constant 0 : index
    %19 = vector.load %arg5[%c0_6, %c0_7] : memref<1x128xf32, #tpu.memory_space<vmem>>, vector<1x128xf32>
    tpu.vector_store %arg5[%c0_6, %c0_7], %18 {strides = array<i32>} : memref<1x128xf32, #tpu.memory_space<vmem>>, vector<1x128xf32>,
    %c0_8 = arith.constant 0 : index
    %c0_9 = arith.constant 0 : index
    %20 = vector.load %arg6[%c0_8, %c0_9] : memref<1x128xf32, #tpu.memory_space<vmem>>, vector<1x128xf32>
    %21 = arith.extui %12 : vector<1x128xi1> to vector<1x128xi32>
    %22 = arith.sitofp %21 : vector<1x128xi32> to vector<1x128xf32>
    %23 = arith.addf %20, %22 : vector<1x128xf32>
    %c0_10 = arith.constant 0 : index
    %c0_11 = arith.constant 0 : index
    %24 = vector.load %arg6[%c0_10, %c0_11] : memref<1x128xf32, #tpu.memory_space<vmem>>, vector<1x128xf32>
    tpu.vector_store %arg6[%c0_10, %c0_11], %23 {strides = array<i32>} : memref<1x128xf32, #tpu.memory_space<vmem>>, vector<1x128xf32>,
    %c0_12 = arith.constant 0 : index
    %c0_13 = arith.constant 0 : index
    %25 = vector.load %arg7[%c0_12, %c0_13] : memref<1x128xf32, #tpu.memory_space<vmem>>, vector<1x128xf32>
    %26 = arith.subf %6, %7 : vector<3x128xf32>
    %27 = math.absf %26 : vector<3x128xf32>
    %cst_14 = arith.constant 0.000000e+00 : f32
    %28 = vector.shape_cast %12 : vector<1x128xi1> to vector<1x128xi1>
    %29 = vector.broadcast %28 : vector<1x128xi1> to vector<3x128xi1>
    %30 = vector.broadcast %cst_14 : f32 to vector<3x128xf32>
    %31 = arith.select %29, %27, %30 : vector<3x128xi1>, vector<3x128xf32>
    %cst_15 = arith.constant dense<0.000000e+00> : vector<128xf32>
    %32 = vector.multi_reduction <add>, %31, %cst_15 [0] : vector<3x128xf32> to vector<128xf32>
    %33 = vector.shape_cast %32 : vector<128xf32> to vector<1x128xf32>
    %34 = arith.addf %25, %33 : vector<1x128xf32>
    %c0_16 = arith.constant 0 : index
    %c0_17 = arith.constant 0 : index
    %35 = vector.load %arg7[%c0_16, %c0_17] : memref<1x128xf32, #tpu.memory_space<vmem>>, vector<1x128xf32>
    tpu.vector_store %arg7[%c0_16, %c0_17], %34 {strides = array<i32>} : memref<1x128xf32, #tpu.memory_space<vmem>>, vector<1x128xf32>,
    %c0_18 = arith.constant 0 : index
    %c0_19 = arith.constant 0 : index
    %36 = vector.load %arg2[%c0_18, %c0_19] : memref<16x128xf32, #tpu.memory_space<vmem>>, vector<16x128xf32>
    %c0_20 = arith.constant 0 : index
    %c0_21 = arith.constant 0 : index
    %37 = vector.load %arg3[%c0_20, %c0_21] : memref<16x128xf32, #tpu.memory_space<vmem>>, vector<16x128xf32>
    %cst_22 = arith.constant 1.000000e-01 : f32
    %38 = vector.broadcast %cst_22 : f32 to vector<1x128xf32>
    %39 = arith.subf %4, %38 : vector<1x128xf32>
    %cst_23 = arith.constant 1.000000e-01 : f32
    %40 = vector.broadcast %cst_23 : f32 to vector<1x128xf32>
    %41 = arith.addf %4, %40 : vector<1x128xf32>
    %cst_24 = arith.constant 0.000000e+00 : f32
    %42 = vector.broadcast %cst_24 : f32 to vector<1x128xf32>
    %43 = arith.cmpf ogt, %4, %42 : vector<1x128xf32>
    %cst_25 = arith.constant 5.000000e+00 : f32
    %44 = vector.broadcast %cst_25 : f32 to vector<1x128xf32>
    %45 = arith.cmpf olt, %4, %44 : vector<1x128xf32>
    %46 = arith.andi %43, %45 : vector<1x128xi1>
    %47 = vector.broadcast %39 : vector<1x128xf32> to vector<16x128xf32>
    %48 = arith.cmpf olt, %36, %47 : vector<16x128xf32>
    %49 = vector.broadcast %41 : vector<1x128xf32> to vector<16x128xf32>
    %50 = arith.cmpf ogt, %36, %49 : vector<16x128xf32>
    %cst_26 = arith.constant dense<true> : vector<16x128xi1>
    %51 = arith.xori %48, %cst_26 : vector<16x128xi1>
    %cst_27 = arith.constant dense<true> : vector<16x128xi1>
    %52 = arith.xori %50, %cst_27 : vector<16x128xi1>
    %53 = vector.broadcast %46 : vector<1x128xi1> to vector<16x128xi1>
    %54 = arith.andi %52, %53 : vector<16x128xi1>
    %55 = arith.andi %51, %54 : vector<16x128xi1>
    %c0_28 = arith.constant 0 : index
    %c0_29 = arith.constant 0 : index
    %56 = vector.load %arg9[%c0_28, %c0_29] : memref<1x128xf32, #tpu.memory_space<vmem>>, vector<1x128xf32>
    %57 = arith.extui %48 : vector<16x128xi1> to vector<16x128xi32>
    %58 = arith.sitofp %57 : vector<16x128xi32> to vector<16x128xf32>
    %cst_30 = arith.constant dense<0.000000e+00> : vector<128xf32>
    %59 = vector.multi_reduction <add>, %58, %cst_30 [0] : vector<16x128xf32> to vector<128xf32>
    %60 = vector.shape_cast %59 : vector<128xf32> to vector<1x128xf32>
    %61 = arith.addf %56, %60 : vector<1x128xf32>
    %c0_31 = arith.constant 0 : index
    %c0_32 = arith.constant 0 : index
    %62 = vector.load %arg9[%c0_31, %c0_32] : memref<1x128xf32, #tpu.memory_space<vmem>>, vector<1x128xf32>
    tpu.vector_store %arg9[%c0_31, %c0_32], %61 {strides = array<i32>} : memref<1x128xf32, #tpu.memory_space<vmem>>, vector<1x128xf32>,
    %c0_33 = arith.constant 0 : index
    %c0_34 = arith.constant 0 : index
    %63 = vector.load %arg11[%c0_33, %c0_34] : memref<1x128xf32, #tpu.memory_space<vmem>>, vector<1x128xf32>
    %64 = arith.extui %55 : vector<16x128xi1> to vector<16x128xi32>
    %65 = arith.sitofp %64 : vector<16x128xi32> to vector<16x128xf32>
    %cst_35 = arith.constant dense<0.000000e+00> : vector<128xf32>
    %66 = vector.multi_reduction <add>, %65, %cst_35 [0] : vector<16x128xf32> to vector<128xf32>
    %67 = vector.shape_cast %66 : vector<128xf32> to vector<1x128xf32>
    %68 = arith.addf %63, %67 : vector<1x128xf32>
    %c0_36 = arith.constant 0 : index
    %c0_37 = arith.constant 0 : index
    %69 = vector.load %arg11[%c0_36, %c0_37] : memref<1x128xf32, #tpu.memory_space<vmem>>, vector<1x128xf32>
    tpu.vector_store %arg11[%c0_36, %c0_37], %68 {strides = array<i32>} : memref<1x128xf32, #tpu.memory_space<vmem>>, vector<1x128xf32>,
    %c0_38 = arith.constant 0 : index
    %c0_39 = arith.constant 0 : index
    %70 = vector.load %arg8[%c0_38, %c0_39] : memref<1x128xf32, #tpu.memory_space<vmem>>, vector<1x128xf32>
    %cst_40 = arith.constant 1.000000e+00 : f32
    %71 = vector.broadcast %cst_40 : f32 to vector<16x128xf32>
    %72 = arith.subf %37, %71 : vector<16x128xf32>
    %73 = arith.mulf %72, %72 : vector<16x128xf32>
    %cst_41 = arith.constant 0.000000e+00 : f32
    %74 = vector.broadcast %cst_41 : f32 to vector<16x128xf32>
    %75 = arith.select %48, %73, %74 : vector<16x128xi1>, vector<16x128xf32>
    %cst_42 = arith.constant dense<0.000000e+00> : vector<128xf32>
    %76 = vector.multi_reduction <add>, %75, %cst_42 [0] : vector<16x128xf32> to vector<128xf32>
    %77 = vector.shape_cast %76 : vector<128xf32> to vector<1x128xf32>
    %78 = arith.addf %70, %77 : vector<1x128xf32>
    %c0_43 = arith.constant 0 : index
    %c0_44 = arith.constant 0 : index
    %79 = vector.load %arg8[%c0_43, %c0_44] : memref<1x128xf32, #tpu.memory_space<vmem>>, vector<1x128xf32>
    tpu.vector_store %arg8[%c0_43, %c0_44], %78 {strides = array<i32>} : memref<1x128xf32, #tpu.memory_space<vmem>>, vector<1x128xf32>,
    %c0_45 = arith.constant 0 : index
    %c0_46 = arith.constant 0 : index
    %80 = vector.load %arg10[%c0_45, %c0_46] : memref<1x128xf32, #tpu.memory_space<vmem>>, vector<1x128xf32>
    %cst_47 = arith.constant 1.000000e-01 : f32
    %81 = vector.broadcast %cst_47 : f32 to vector<16x128xf32>
    %82 = arith.mulf %37, %81 : vector<16x128xf32>
    %83 = arith.addf %36, %82 : vector<16x128xf32>
    %84 = vector.broadcast %4 : vector<1x128xf32> to vector<16x128xf32>
    %85 = arith.subf %83, %84 : vector<16x128xf32>
    %86 = arith.mulf %85, %85 : vector<16x128xf32>
    %cst_48 = arith.constant 0.000000e+00 : f32
    %87 = vector.broadcast %cst_48 : f32 to vector<16x128xf32>
    %88 = arith.select %55, %86, %87 : vector<16x128xi1>, vector<16x128xf32>
    %cst_49 = arith.constant dense<0.000000e+00> : vector<128xf32>
    %89 = vector.multi_reduction <add>, %88, %cst_49 [0] : vector<16x128xf32> to vector<128xf32>
    %90 = vector.shape_cast %89 : vector<128xf32> to vector<1x128xf32>
    %91 = arith.addf %80, %90 : vector<1x128xf32>
    %c0_50 = arith.constant 0 : index
    %c0_51 = arith.constant 0 : index
    %92 = vector.load %arg10[%c0_50, %c0_51] : memref<1x128xf32, #tpu.memory_space<vmem>>, vector<1x128xf32>
    tpu.vector_store %arg10[%c0_50, %c0_51], %91 {strides = array<i32>} : memref<1x128xf32, #tpu.memory_space<vmem>>, vector<1x128xf32>,
    %c0_i32_52 = arith.constant 0 : i32
    %93 = arith.cmpi eq, %arg0, %c0_i32_52 : i32
    %94 = arith.extui %93 : i1 to i32
    %c0_i32_53 = arith.constant 0 : i32
    %95 = arith.cmpi ne, %94, %c0_i32_53 : i32
    scf.if %95 {
      %c0_54 = arith.constant 0 : index
      %c0_55 = arith.constant 0 : index
      %96 = vector.load %arg5[%c0_54, %c0_55] : memref<1x128xf32, #tpu.memory_space<vmem>>, vector<1x128xf32>
      %97 = vector.shape_cast %96 : vector<1x128xf32> to vector<1x1x128xf32>
      %cst_56 = arith.constant dense<0.000000e+00> : vector<1xf32>
      %98 = vector.multi_reduction <add>, %97, %cst_56 [1, 2] : vector<1x1x128xf32> to vector<1xf32>
      %99 = vector.shape_cast %98 : vector<1xf32> to vector<1x1x1xf32>
      %100 = vector.extract %99[0, 0, 0] : f32 from vector<1x1x1xf32>
      %c0_57 = arith.constant 0 : index
      %101 = memref.load %arg4[%c0_57] : memref<7xf32, #tpu.memory_space<smem>>
      memref.store %100, %arg4[%c0_57] : memref<7xf32, #tpu.memory_space<smem>>
      %c0_58 = arith.constant 0 : index
      %c0_59 = arith.constant 0 : index
      %102 = vector.load %arg6[%c0_58, %c0_59] : memref<1x128xf32, #tpu.memory_space<vmem>>, vector<1x128xf32>
      %103 = vector.shape_cast %102 : vector<1x128xf32> to vector<1x1x128xf32>
      %cst_60 = arith.constant dense<0.000000e+00> : vector<1xf32>
      %104 = vector.multi_reduction <add>, %103, %cst_60 [1, 2] : vector<1x1x128xf32> to vector<1xf32>
      %105 = vector.shape_cast %104 : vector<1xf32> to vector<1x1x1xf32>
      %106 = vector.extract %105[0, 0, 0] : f32 from vector<1x1x1xf32>
      %c1 = arith.constant 1 : index
      %107 = memref.load %arg4[%c1] : memref<7xf32, #tpu.memory_space<smem>>
      memref.store %106, %arg4[%c1] : memref<7xf32, #tpu.memory_space<smem>>
      %c0_61 = arith.constant 0 : index
      %c0_62 = arith.constant 0 : index
      %108 = vector.load %arg7[%c0_61, %c0_62] : memref<1x128xf32, #tpu.memory_space<vmem>>, vector<1x128xf32>
      %109 = vector.shape_cast %108 : vector<1x128xf32> to vector<1x1x128xf32>
      %cst_63 = arith.constant dense<0.000000e+00> : vector<1xf32>
      %110 = vector.multi_reduction <add>, %109, %cst_63 [1, 2] : vector<1x1x128xf32> to vector<1xf32>
      %111 = vector.shape_cast %110 : vector<1xf32> to vector<1x1x1xf32>
      %112 = vector.extract %111[0, 0, 0] : f32 from vector<1x1x1xf32>
      %c2 = arith.constant 2 : index
      %113 = memref.load %arg4[%c2] : memref<7xf32, #tpu.memory_space<smem>>
      memref.store %112, %arg4[%c2] : memref<7xf32, #tpu.memory_space<smem>>
      %c0_64 = arith.constant 0 : index
      %c0_65 = arith.constant 0 : index
      %114 = vector.load %arg8[%c0_64, %c0_65] : memref<1x128xf32, #tpu.memory_space<vmem>>, vector<1x128xf32>
      %115 = vector.shape_cast %114 : vector<1x128xf32> to vector<1x1x128xf32>
      %cst_66 = arith.constant dense<0.000000e+00> : vector<1xf32>
      %116 = vector.multi_reduction <add>, %115, %cst_66 [1, 2] : vector<1x1x128xf32> to vector<1xf32>
      %117 = vector.shape_cast %116 : vector<1xf32> to vector<1x1x1xf32>
      %118 = vector.extract %117[0, 0, 0] : f32 from vector<1x1x1xf32>
      %c3 = arith.constant 3 : index
      %119 = memref.load %arg4[%c3] : memref<7xf32, #tpu.memory_space<smem>>
      memref.store %118, %arg4[%c3] : memref<7xf32, #tpu.memory_space<smem>>
      %c0_67 = arith.constant 0 : index
      %c0_68 = arith.constant 0 : index
      %120 = vector.load %arg9[%c0_67, %c0_68] : memref<1x128xf32, #tpu.memory_space<vmem>>, vector<1x128xf32>
      %121 = vector.shape_cast %120 : vector<1x128xf32> to vector<1x1x128xf32>
      %cst_69 = arith.constant dense<0.000000e+00> : vector<1xf32>
      %122 = vector.multi_reduction <add>, %121, %cst_69 [1, 2] : vector<1x1x128xf32> to vector<1xf32>
      %123 = vector.shape_cast %122 : vector<1xf32> to vector<1x1x1xf32>
      %124 = vector.extract %123[0, 0, 0] : f32 from vector<1x1x1xf32>
      %c4 = arith.constant 4 : index
      %125 = memref.load %arg4[%c4] : memref<7xf32, #tpu.memory_space<smem>>
      memref.store %124, %arg4[%c4] : memref<7xf32, #tpu.memory_space<smem>>
      %c0_70 = arith.constant 0 : index
      %c0_71 = arith.constant 0 : index
      %126 = vector.load %arg10[%c0_70, %c0_71] : memref<1x128xf32, #tpu.memory_space<vmem>>, vector<1x128xf32>
      %127 = vector.shape_cast %126 : vector<1x128xf32> to vector<1x1x128xf32>
      %cst_72 = arith.constant dense<0.000000e+00> : vector<1xf32>
      %128 = vector.multi_reduction <add>, %127, %cst_72 [1, 2] : vector<1x1x128xf32> to vector<1xf32>
      %129 = vector.shape_cast %128 : vector<1xf32> to vector<1x1x1xf32>
      %130 = vector.extract %129[0, 0, 0] : f32 from vector<1x1x1xf32>
      %c5 = arith.constant 5 : index
      %131 = memref.load %arg4[%c5] : memref<7xf32, #tpu.memory_space<smem>>
      memref.store %130, %arg4[%c5] : memref<7xf32, #tpu.memory_space<smem>>
      %c0_73 = arith.constant 0 : index
      %c0_74 = arith.constant 0 : index
      %132 = vector.load %arg11[%c0_73, %c0_74] : memref<1x128xf32, #tpu.memory_space<vmem>>, vector<1x128xf32>
      %133 = vector.shape_cast %132 : vector<1x128xf32> to vector<1x1x128xf32>
      %cst_75 = arith.constant dense<0.000000e+00> : vector<1xf32>
      %134 = vector.multi_reduction <add>, %133, %cst_75 [1, 2] : vector<1x1x128xf32> to vector<1xf32>
      %135 = vector.shape_cast %134 : vector<1xf32> to vector<1x1x1xf32>
      %136 = vector.extract %135[0, 0, 0] : f32 from vector<1x1x1xf32>
      %c6 = arith.constant 6 : index
      %137 = memref.load %arg4[%c6] : memref<7xf32, #tpu.memory_space<smem>>
      memref.store %136, %arg4[%c6] : memref<7xf32, #tpu.memory_space<smem>>
    } else {
    }
    return
  }
  func.func @transform_0(%arg0: i32) -> (i32, i32) {
    %c0_i32 = arith.constant 0 : i32
    %c0_i32_0 = arith.constant 0 : i32
    return %c0_i32, %arg0 : i32, i32
  }
  func.func @transform_1(%arg0: i32) -> (i32, i32) {
    %c0_i32 = arith.constant 0 : i32
    %c0_i32_0 = arith.constant 0 : i32
    return %c0_i32, %arg0 : i32, i32
  }
  func.func @transform_2(%arg0: i32) -> (i32, i32) {
    %c0_i32 = arith.constant 0 : i32
    %c0_i32_0 = arith.constant 0 : i32
    return %c0_i32, %arg0 : i32, i32
  }
  func.func @transform_3(%arg0: i32) -> i32 {
    %c0_i32 = arith.constant 0 : i32
    %c0_i32_0 = arith.constant 0 : i32
    return %c0_i32 : i32
  }
}

</mosaic_0001>

<llo_original>
// kernel: tpu_custom_call.1
$region0: #{tpu_custom_call.1}
  #allocation0 [shape = 'u32[]', space=smem, size = 0x4, offset = 0x4, fixed_abs, tag = 'smem constant byte address 0x4 - core index']
  #allocation1 [shape = 'u32[144,128]{1,0:T(1,128)}', space=vmem, size = 0x12000, scoped, tag = 'internal scratch']
  #allocation2 [shape = 'f32[1,128]{1,0:T(1,128)}', space=vmem, size = 0x200, scoped, tag = 'scratch operand']
  #allocation3 [shape = 'f32[1,128]{1,0:T(1,128)}', space=vmem, size = 0x200, scoped, tag = 'scratch operand']
  #allocation4 [shape = 'f32[1,128]{1,0:T(1,128)}', space=vmem, size = 0x200, scoped, tag = 'scratch operand']
  #allocation5 [shape = 'f32[1,128]{1,0:T(1,128)}', space=vmem, size = 0x200, scoped, tag = 'scratch operand']
  #allocation6 [shape = 'f32[1,128]{1,0:T(1,128)}', space=vmem, size = 0x200, scoped, tag = 'scratch operand']
  #allocation7 [shape = 'f32[1,128]{1,0:T(1,128)}', space=vmem, size = 0x200, scoped, tag = 'scratch operand']
  #allocation8 [shape = 'f32[1,128]{1,0:T(1,128)}', space=vmem, size = 0x200, scoped, tag = 'scratch operand']
  %s0 = inlined_call_operand.hbm [shape: f32[8,128], index: 0, kind: input, shape index: {}]
  %s1 = inlined_call_operand.hbm [shape: f32[16,128], index: 1, kind: input, shape index: {}]
  %s2 = inlined_call_operand.hbm [shape: f32[16,128], index: 2, kind: input, shape index: {}]
  %s3 = inlined_call_operand.hbm [shape: f32[7], index: 3, kind: output, shape index: {}]
  %s4 = sld [smem:[#allocation0]]
  $region42: #{tpu_custom_call.1} parent=0
    _
  %s6 = ssub.s32 1, %s4
  %s7 = scalar_select 0, %s6, %s4
  $region1: #{tpu_custom_call.1} parent=0
    #allocation9 [shape = 'u8[4096]{0}', space=vmem, size = 0x1000, scoped, tag = 'input window, operand 0, single buffered']
    #allocation10 [shape = 's32[1]{0}', space=sflag, size = 0x4, scoped, tag = 'scoped memory for tpu_custom_call.1']
    #allocation11 [shape = 's32[1]{0}', space=sflag, size = 0x4, scoped, tag = 'scoped memory for tpu_custom_call.1']
    #allocation12 [shape = 'u8[8192]{0}', space=vmem, size = 0x2000, scoped, tag = 'input window, operand 1, single buffered']
    #allocation13 [shape = 's32[1]{0}', space=sflag, size = 0x4, scoped, tag = 'scoped memory for tpu_custom_call.1']
    #allocation14 [shape = 'u8[8192]{0}', space=vmem, size = 0x2000, scoped, tag = 'input window, operand 2, single buffered']
    #allocation15 [shape = 'u8[512]{0}', space=smem, size = 0x200, scoped, tag = 'output window, operand 0, single buffered']
    %8 = vsyncpa [#allocation10], 0
    %9 = vsyncpa [#allocation13], 0
    %10 = vsyncpa [#allocation11], 0
    // Predicated region
    $region2: #{tpu_custom_call.1} parent=1 // pred_check
      _
    $region3: #{tpu_custom_call.1} parent=1 // pred_check_branch
      %12 = sbr.rel (0) target = $region5
    $region4: #{tpu_custom_call.1} parent=1 // pred_region
      %s14 = ssub.s32 128, 128
      %15 = vsyncadd [#allocation10], %s14
      %s17 = sshll.u32 [#allocation9], 4
      %s18 = int_to_ptr.vmem [resolvable:$true] %s17
      %20 = dma.hbm_to_vmem [thread:$0]  %s0, 128, %s18, [#allocation10]
    $region5: #{tpu_custom_call.1} parent=1 // pred_fallthru
      _
    // Predicated region
    $region6: #{tpu_custom_call.1} parent=1 // pred_check
      _
    $region7: #{tpu_custom_call.1} parent=1 // pred_check_branch
      %22 = sbr.rel (0) target = $region9
    $region8: #{tpu_custom_call.1} parent=1 // pred_region
      %s24 = ssub.s32 256, 256
      %25 = vsyncadd [#allocation13], %s24
      %s26 = sshll.u32 [#allocation12], 4
      %s27 = int_to_ptr.vmem [resolvable:$true] %s26
      %32 = dma.hbm_to_vmem [thread:$0]  %s1, 256, %s27, [#allocation13], 128, 128, 8
    $region9: #{tpu_custom_call.1} parent=1 // pred_fallthru
      _
    // Predicated region
    $region10: #{tpu_custom_call.1} parent=1 // pred_check
      _
    $region11: #{tpu_custom_call.1} parent=1 // pred_check_branch
      %34 = sbr.rel (0) target = $region13
    $region12: #{tpu_custom_call.1} parent=1 // pred_region
      %s36 = ssub.s32 256, 256
      %37 = vsyncadd [#allocation13], %s36
      %s38 = sshll.u32 [#allocation14], 4
      %s39 = int_to_ptr.vmem [resolvable:$true] %s38
      %44 = dma.hbm_to_vmem [thread:$0]  %s2, 256, %s39, [#allocation13], 128, 128, 8
    $region13: #{tpu_custom_call.1} parent=1 // pred_fallthru
      _
    // Predicated region
    $region14: #{tpu_custom_call.1} parent=1 // pred_check
      _
    $region15: #{tpu_custom_call.1} parent=1 // pred_check_branch
      %46 = sbr.rel (0) target = $region17
    $region16: #{tpu_custom_call.1} parent=1 // pred_region
      %47 = dma.done [#allocation10], 128
    $region17: #{tpu_custom_call.1} parent=1 // pred_fallthru
      _
    // Predicated region
    $region18: #{tpu_custom_call.1} parent=1 // pred_check
      _
    $region19: #{tpu_custom_call.1} parent=1 // pred_check_branch
      %49 = sbr.rel (0) target = $region21
    $region20: #{tpu_custom_call.1} parent=1 // pred_region
      %50 = dma.done [#allocation13], 256
    $region21: #{tpu_custom_call.1} parent=1 // pred_fallthru
      _
    // Predicated region
    $region22: #{tpu_custom_call.1} parent=1 // pred_check
      _
    $region23: #{tpu_custom_call.1} parent=1 // pred_check_branch
      %52 = sbr.rel (0) target = $region25
    $region24: #{tpu_custom_call.1} parent=1 // pred_region
      %53 = dma.done [#allocation13], 256
    $region25: #{tpu_custom_call.1} parent=1 // pred_fallthru
      _
    %p54 = scmp.eq.s32.totalorder 0, 0
    // Predicated region
    $region26: #{tpu_custom_call.1} parent=1 // pred_check
      %p55 = pneg %p54
    $region27: #{tpu_custom_call.1} parent=1 // pred_check_branch
      %57 = sbr.rel (%p55) target = $region29
    $region28: #{tpu_custom_call.1} parent=1 // pred_region
      %58 = vst [vmem:[#allocation2] sm:$0x1] 0.0
      %59 = vst [vmem:[#allocation3] sm:$0x1] 0.0
      %60 = vst [vmem:[#allocation4] sm:$0x1] 0.0
      %61 = vst [vmem:[#allocation5] sm:$0x1] 0.0
      %62 = vst [vmem:[#allocation6] sm:$0x1] 0.0
      %63 = vst [vmem:[#allocation7] sm:$0x1] 0.0
      %64 = vst [vmem:[#allocation8] sm:$0x1] 0.0
    $region29: #{tpu_custom_call.1} parent=1 // pred_fallthru
      _
    %v65 = vld [vmem:[#allocation9] sm:$0xff]
    %vm66 = vcmp.gt.f32.partialorder %v65, 0.01
    %vm67 = vcmp.lt.f32.partialorder %v65, 5.0
    %vm68 = vmand %vm66, %vm67
    %v69 = vld [vmem:[#allocation2] sm:$0x1]
    %v71 = vrot.slane %v65, 1
    %v73 = vsub.f32 %v65, %v71
    %v74 = vand.u32 2147483647, %v73
    %v75 = vsel %vm68, %v74, 0.0
    %v76 = vadd.f32 %v69, %v75
    %77 = vst [vmem:[#allocation2] sm:$0x1] %v76
    %v78 = vld [vmem:[#allocation3] sm:$0x1]
    %v79 = vsel %vm68, 1, 0
    %v80 = vcvt.s32.f32 %v79
    %v81 = vadd.f32 %v78, %v80
    %82 = vst [vmem:[#allocation3] sm:$0x1] %v81
    %v83 = vld [vmem:[#allocation4] sm:$0x1]
    %v84 = vrot.slane %v65, 3
    %v86 = vsub.f32 %v65, %v84
    %v87 = vand.u32 2147483647, %v86
    %v88 = vlaneseq
    %v89 = vshrl.u32 %v88, 7
    %v90 = vsub.s32 0, %v89
    %v91 = vrot.slane %v79, %v90
    %vm92 = vcmp.eq.s32.totalorder %v91, 1
    %v93 = vsel %vm92, %v87, 0.0
    %v95 = vrot.slane %v93, 2
    %vm97 = vcmask 1042432
    %v98 = vsel %vm97, %v95, 0.0
    %v99 = vrot.slane %v98, 4
    %v100 = vadd.f32 %v98, %v99
    %v101 = vrot.slane %v100, 2
    %v102 = vadd.f32 %v100, %v101
    %v103 = vrot.slane %v102, 1
    %v104 = vadd.f32 %v102, %v103
    %v105 = vadd.f32 %v83, %v104
    %106 = vst [vmem:[#allocation4] sm:$0x1] %v105
    %v107 = vld [vmem:[#allocation12] sm:$0xff]
    %v108 = vld [vmem:[#allocation12 + $0x8] sm:$0xff]
    %v109 = vld [vmem:[#allocation14] sm:$0xff]
    %v110 = vld [vmem:[#allocation14 + $0x8] sm:$0xff]
    %v111 = vsub.f32 %v65, 0.1
    %v112 = vadd.f32 %v65, 0.1
    %vm113 = vcmp.gt.f32.partialorder %v65, 0.0
    %vm114 = vmand %vm113, %vm67
    %v115 = vlaneseq
    %v116 = vshrl.u32 %v115, 7
    %v117 = vsub.s32 0, %v116
    %v118 = vrot.slane %v111, %v117
    %vm119 = vcmp.lt.f32.partialorder %v107, %v118
    %vm120 = vcmp.lt.f32.partialorder %v108, %v118
    %v121 = vlaneseq
    %v122 = vshrl.u32 %v121, 7
    %v123 = vsub.s32 0, %v122
    %v124 = vrot.slane %v112, %v123
    %vm125 = vcmp.gt.f32.partialorder %v107, %v124
    %vm126 = vcmp.gt.f32.partialorder %v108, %v124
    %vm127 = vmxor %vm119, 1
    %vm128 = vmxor %vm120, 1
    %vm129 = vmxor %vm125, 1
    %vm130 = vmxor %vm126, 1
    %v131 = vsel %vm114, 1, 0
    %v132 = vlaneseq
    %v133 = vshrl.u32 %v132, 7
    %v134 = vsub.s32 0, %v133
    %v135 = vrot.slane %v131, %v134
    %vm136 = vcmp.eq.s32.totalorder %v135, 1
    %vm137 = vmand %vm129, %vm136
    %vm138 = vmand %vm130, %vm136
    %vm139 = vmand %vm127, %vm137
    %vm140 = vmand %vm128, %vm138
    %v141 = vld [vmem:[#allocation6] sm:$0x1]
    %v142 = vsel %vm119, 1, 0
    %v143 = vsel %vm120, 1, 0
    %v144 = vcvt.s32.f32 %v142
    %v145 = vcvt.s32.f32 %v143
    %v146 = vadd.f32 %v144, %v145
    %v147 = vrot.slane %v146, 4
    %v148 = vadd.f32 %v146, %v147
    %v149 = vrot.slane %v148, 2
    %v150 = vadd.f32 %v148, %v149
    %v151 = vrot.slane %v150, 1
    %v152 = vadd.f32 %v150, %v151
    %v153 = vadd.f32 %v141, %v152
    %154 = vst [vmem:[#allocation6] sm:$0x1] %v153
    %v155 = vld [vmem:[#allocation8] sm:$0x1]
    %v156 = vsel %vm139, 1, 0
    %v157 = vsel %vm140, 1, 0
    %v158 = vcvt.s32.f32 %v156
    %v159 = vcvt.s32.f32 %v157
    %v160 = vadd.f32 %v158, %v159
    %v161 = vrot.slane %v160, 4
    %v162 = vadd.f32 %v160, %v161
    %v163 = vrot.slane %v162, 2
    %v164 = vadd.f32 %v162, %v163
    %v165 = vrot.slane %v164, 1
    %v166 = vadd.f32 %v164, %v165
    %v167 = vadd.f32 %v155, %v166
    %168 = vst [vmem:[#allocation8] sm:$0x1] %v167
    %v169 = vld [vmem:[#allocation5] sm:$0x1]
    %v170 = vsub.f32 %v109, 1.0
    %v171 = vsub.f32 %v110, 1.0
    %v172 = vmul.f32 %v170, %v170
    %v173 = vmul.f32 %v171, %v171
    %v174 = vsel %vm119, %v172, 0.0
    %v175 = vsel %vm120, %v173, 0.0
    %v176 = vadd.f32 %v174, %v175
    %v177 = vrot.slane %v176, 4
    %v178 = vadd.f32 %v176, %v177
    %v179 = vrot.slane %v178, 2
    %v180 = vadd.f32 %v178, %v179
    %v181 = vrot.slane %v180, 1
    %v182 = vadd.f32 %v180, %v181
    %v183 = vadd.f32 %v169, %v182
    %184 = vst [vmem:[#allocation5] sm:$0x1] %v183
    %v185 = vld [vmem:[#allocation7] sm:$0x1]
    %v186 = vmul.f32 %v109, 0.1
    %v187 = vmul.f32 %v110, 0.1
    %v188 = vadd.f32 %v107, %v186
    %v189 = vadd.f32 %v108, %v187
    %v190 = vlaneseq
    %v191 = vshrl.u32 %v190, 7
    %v192 = vsub.s32 0, %v191
    %v193 = vrot.slane %v65, %v192
    %v194 = vsub.f32 %v188, %v193
    %v195 = vsub.f32 %v189, %v193
    %v196 = vmul.f32 %v194, %v194
    %v197 = vmul.f32 %v195, %v195
    %v198 = vsel %vm139, %v196, 0.0
    %v199 = vsel %vm140, %v197, 0.0
    %v200 = vadd.f32 %v198, %v199
    %v201 = vrot.slane %v200, 4
    %v202 = vadd.f32 %v200, %v201
    %v203 = vrot.slane %v202, 2
    %v204 = vadd.f32 %v202, %v203
    %v205 = vrot.slane %v204, 1
    %v206 = vadd.f32 %v204, %v205
    %v207 = vadd.f32 %v185, %v206
    %208 = vst [vmem:[#allocation7] sm:$0x1] %v207
    // Predicated region
    $region30: #{tpu_custom_call.1} parent=1 // pred_check
      %p209 = pneg %p54
    $region31: #{tpu_custom_call.1} parent=1 // pred_check_branch
      %211 = sbr.rel (%p209) target = $region33
    $region32: #{tpu_custom_call.1} parent=1 // pred_region
      %v212 = vld [vmem:[#allocation2] sm:$0x1]
      %vm213 = vcmask 1040384
      %v214 = vsel %vm213, %v212, 0.0
      %215 = vadd.xlane.f32.xlu0 %v214
      %v216 = vpop.xlane.xlu0 %215
      %v217 = vrot.slane %v216, 4
      %v218 = vadd.f32 %v216, %v217
      %v219 = vrot.slane %v218, 2
      %v220 = vadd.f32 %v218, %v219
      %v221 = vrot.slane %v220, 1
      %v222 = vadd.f32 %v220, %v221
      %s223 = vtos %v222
      %s224 = scalar_lea.smem [#allocation15], 0
      %225 = sst [smem:[%s224]] %s223
      %v226 = vld [vmem:[#allocation3] sm:$0x1]
      %v227 = vsel %vm213, %v226, 0.0
      %228 = vadd.xlane.f32.xlu0 %v227
      %v229 = vpop.xlane.xlu0 %228
      %v230 = vrot.slane %v229, 4
      %v231 = vadd.f32 %v229, %v230
      %v232 = vrot.slane %v231, 2
      %v233 = vadd.f32 %v231, %v232
      %v234 = vrot.slane %v233, 1
      %v235 = vadd.f32 %v233, %v234
      %s236 = vtos %v235
      %s237 = scalar_lea.smem [#allocation15], 1
      %238 = sst [smem:[%s237]] %s236
      %v239 = vld [vmem:[#allocation4] sm:$0x1]
      %v240 = vsel %vm213, %v239, 0.0
      %241 = vadd.xlane.f32.xlu0 %v240
      %v242 = vpop.xlane.xlu0 %241
      %v243 = vrot.slane %v242, 4
      %v244 = vadd.f32 %v242, %v243
      %v245 = vrot.slane %v244, 2
      %v246 = vadd.f32 %v244, %v245
      %v247 = vrot.slane %v246, 1
      %v248 = vadd.f32 %v246, %v247
      %s249 = vtos %v248
      %s250 = scalar_lea.smem [#allocation15], 2
      %251 = sst [smem:[%s250]] %s249
      %v252 = vld [vmem:[#allocation5] sm:$0x1]
      %v253 = vsel %vm213, %v252, 0.0
      %254 = vadd.xlane.f32.xlu0 %v253
      %v255 = vpop.xlane.xlu0 %254
      %v256 = vrot.slane %v255, 4
      %v257 = vadd.f32 %v255, %v256
      %v258 = vrot.slane %v257, 2
      %v259 = vadd.f32 %v257, %v258
      %v260 = vrot.slane %v259, 1
      %v261 = vadd.f32 %v259, %v260
      %s262 = vtos %v261
      %s263 = scalar_lea.smem [#allocation15], 3
      %264 = sst [smem:[%s263]] %s262
      %v265 = vld [vmem:[#allocation6] sm:$0x1]
      %v266 = vsel %vm213, %v265, 0.0
      %267 = vadd.xlane.f32.xlu0 %v266
      %v268 = vpop.xlane.xlu0 %267
      %v269 = vrot.slane %v268, 4
      %v270 = vadd.f32 %v268, %v269
      %v271 = vrot.slane %v270, 2
      %v272 = vadd.f32 %v270, %v271
      %v273 = vrot.slane %v272, 1
      %v274 = vadd.f32 %v272, %v273
      %s275 = vtos %v274
      %s276 = scalar_lea.smem [#allocation15], 4
      %277 = sst [smem:[%s276]] %s275
      %v278 = vld [vmem:[#allocation7] sm:$0x1]
      %v279 = vsel %vm213, %v278, 0.0
      %280 = vadd.xlane.f32.xlu0 %v279
      %v281 = vpop.xlane.xlu0 %280
      %v282 = vrot.slane %v281, 4
      %v283 = vadd.f32 %v281, %v282
      %v284 = vrot.slane %v283, 2
      %v285 = vadd.f32 %v283, %v284
      %v286 = vrot.slane %v285, 1
      %v287 = vadd.f32 %v285, %v286
      %s288 = vtos %v287
      %s289 = scalar_lea.smem [#allocation15], 5
      %290 = sst [smem:[%s289]] %s288
      %v291 = vld [vmem:[#allocation8] sm:$0x1]
      %v292 = vsel %vm213, %v291, 0.0
      %293 = vadd.xlane.f32.xlu0 %v292
      %v294 = vpop.xlane.xlu0 %293
      %v295 = vrot.slane %v294, 4
      %v296 = vadd.f32 %v294, %v295
      %v297 = vrot.slane %v296, 2
      %v298 = vadd.f32 %v296, %v297
      %v299 = vrot.slane %v298, 1
      %v300 = vadd.f32 %v298, %v299
      %s301 = vtos %v300
      %s302 = scalar_lea.smem [#allocation15], 6
      %303 = sst [smem:[%s302]] %s301
    $region33: #{tpu_custom_call.1} parent=1 // pred_fallthru
      _
    // Predicated region
    $region34: #{tpu_custom_call.1} parent=1 // pred_check
      _
    $region35: #{tpu_custom_call.1} parent=1 // pred_check_branch
      %305 = sbr.rel (0) target = $region37
    $region36: #{tpu_custom_call.1} parent=1 // pred_region
      %s307 = ssub.s32 16, 16
      %308 = vsyncadd [#allocation11], %s307
      %311 = dma.smem_to_hbm [#allocation15], 16, %s3, [#allocation11]
    $region37: #{tpu_custom_call.1} parent=1 // pred_fallthru
      _
    // Predicated region
    $region38: #{tpu_custom_call.1} parent=1 // pred_check
      _
    $region39: #{tpu_custom_call.1} parent=1 // pred_check_branch
      %313 = sbr.rel (0) target = $region41
    $region40: #{tpu_custom_call.1} parent=1 // pred_region
      %314 = dma.done [#allocation11], 16
    $region41: #{tpu_custom_call.1} parent=1 // pred_fallthru
      _
    %315 = sfence
    %316 = vsyncpa [#allocation10], 1
    %317 = vsyncpa [#allocation13], 1
    %318 = vsyncpa [#allocation11], 1

</llo_original>
